<compile_context>
chip_gen: v7x
topology: tpu7x:2x2x1
jax: 0.10.0
libtpu: 0.0.40
codegen_flags: <defaults>
</compile_context>

<pallas_src>
import math

import jax
import jax.numpy as jnp
from jax.experimental import pallas as pl
from jax.experimental.pallas import tpu as pltpu

SCALE = 64.0
MARGIN = 0.5
COS_M = math.cos(MARGIN)
SIN_M = math.sin(MARGIN)
THETA = math.cos(math.pi - MARGIN)
SINMM = math.sin(math.pi - MARGIN) * MARGIN
EASY_MARGIN = False

# ~4 MiB per logits block (input and output each double-buffered => ~16 MiB
# resident), comfortably under v7x's 64 MiB VMEM and the 48 MiB scoped limit.
_BLOCK_BYTES = 4 * 1024 * 1024
_VMEM_LIMIT_BYTES = 48 * 1024 * 1024


def _arcface_kernel(side_ref, logits_ref, out_ref):
    # side_ref  : (tile_n, 2) int32 -- col 0 = label, col 1 = final_t f32 bits
    # logits_ref / out_ref: (tile_n, tile_c) logits dtype
    j = pl.program_id(1)
    x = logits_ref[...]
    tile_c = x.shape[-1]

    lab = side_ref[:, 0:1]                                    # (tile_n, 1) int32
    tgt = pltpu.bitcast(side_ref[:, 1:2], jnp.float32)        # (tile_n, 1) f32

    # Compare against a *local* iota: shift the label by the tile's column
    # offset (a (tile_n, 1) sublane-only subtract).  label == -1 (ignored row)
    # and out-of-range labels can never match a column in [0, tile_c), so no
    # extra mask term is needed.
    lab_local = lab - j * tile_c
    col = jax.lax.broadcasted_iota(jnp.int32, x.shape, 1)
    is_target = col == lab_local

    out_ref[...] = jnp.where(is_target, tgt.astype(x.dtype), x) * SCALE


def arcface_forward(logits, labels, *, tile_n=None, tile_c=None):
    """logits: (N, C) cosine similarities, labels: (N,) int32
    (label == -1 means 'ignore this row').  Returns (N, C), same dtype.

    Note: labels >= C are treated as 'no target column' (row only scaled);
    the PyTorch original would raise an indexing error for such labels.
    """
    n, c = logits.shape
    dtype = logits.dtype
    itemsize = jnp.dtype(dtype).itemsize
    labels_i = labels.astype(jnp.int32)

    # ---- hoisted per-row margin math (O(N), done once in the wrapper) ------
    safe_lab = jnp.clip(labels_i, 0, c - 1)
    t = jnp.take_along_axis(logits, safe_lab[:, None], axis=1).astype(jnp.float32)
    sin_t = jnp.sqrt(jnp.maximum(1.0 - t * t, 0.0))
    cos_theta_m = t * COS_M - sin_t * SIN_M
    if EASY_MARGIN:
        final_t = jnp.where(t > 0.0, cos_theta_m, t)
    else:
        final_t = jnp.where(t > THETA, cos_theta_m, t - SINMM)
    # Pack [label, final_t-as-f32-bits] into one (N, 2) int32 side input.
    final_bits = jax.lax.bitcast_convert_type(final_t, jnp.int32)     # (N, 1)
    side = jnp.concatenate([labels_i[:, None], final_bits], axis=1)   # (N, 2)

    # ---- tile selection: lane-dense, ~4 MiB blocks, cdiv grids -------------
    # sublane multiple: 8 for 4-byte, 16 for 2-byte, 32 for 1-byte dtypes
    sub_m = 8 * max(1, 4 // itemsize)
    budget_elems = _BLOCK_BYTES // itemsize
    if tile_n is None:
        cap_n = 256                       # multiple of 32 -> legal for all dtypes
        tile_n = n if n <= cap_n else cap_n
    if tile_c is None:
        tc = (budget_elems // max(tile_n, 1)) // 128 * 128
        tc = max(tc, 128)
        tile_c = c if c <= tc else tc
    del sub_m  # cap_n already satisfies every sublane multiple

    grid = (pl.cdiv(n, tile_n), pl.cdiv(c, tile_c))

    return pl.pallas_call(
        _arcface_kernel,
        out_shape=jax.ShapeDtypeStruct((n, c), dtype),
        grid_spec=pltpu.PrefetchScalarGridSpec(
            num_scalar_prefetch=0,
            grid=grid,
            in_specs=[
                pl.BlockSpec((tile_n, 2), lambda i, j: (i, 0)),        # side
                pl.BlockSpec((tile_n, tile_c), lambda i, j: (i, j)),   # logits
            ],
            out_specs=pl.BlockSpec((tile_n, tile_c), lambda i, j: (i, j)),
        ),
        compiler_params=pltpu.CompilerParams(
            dimension_semantics=("parallel", "parallel"),
            vmem_limit_bytes=_VMEM_LIMIT_BYTES,
        ),
        # logits (input index 1) aliases the single output: same shape/dtype,
        # every element written.  The caller should donate `logits` (see
        # __main__) so XLA does not insert a defensive copy.
        input_output_aliases={1: 0},
        cost_estimate=pl.CostEstimate(
            flops=3 * n * c,
            transcendentals=0,
            bytes_accessed=2 * n * c * itemsize + n * 8,
        ),
    )(side, logits)


def _reference(logits, labels):
    # Pure-JAX reference mirroring the PyTorch forward.
    n, c = logits.shape
    safe_lab = jnp.clip(labels, 0, c - 1)
    t = jnp.take_along_axis(logits, safe_lab[:, None], axis=1)[:, 0]
    sin_t = jnp.sqrt(jnp.maximum(1.0 - t * t, 0.0))
    cos_theta_m = t * COS_M - sin_t * SIN_M
    final_t = jnp.where(t > THETA, cos_theta_m, t - SINMM)
    valid = labels != -1
    row = jnp.arange(n)
    updated = logits.at[row, safe_lab].set(
        jnp.where(valid, final_t, logits[row, safe_lab])
    )
    return updated * SCALE


if __name__ == "__main__":
    key = jax.random.PRNGKey(0)
    k1, k2, k3, k4 = jax.random.split(key, 4)

    # --- test 1: small aligned shapes; donate `logits` so the in->out alias
    #             inside pallas_call really elides the extra HBM copy.
    N, C = 8, 256
    logits = jax.random.uniform(k1, (N, C), jnp.float32, minval=-0.99, maxval=0.99)
    labels = jax.random.randint(k2, (N,), 0, C, dtype=jnp.int32)
    labels = labels.at[3].set(-1)  # one "ignored" row, like the PyTorch index filter
    ref = _reference(logits, labels)

    run = jax.jit(arcface_forward, donate_argnums=(0,))
    out = jax.block_until_ready(run(logits, labels))
    assert jnp.allclose(out, ref, atol=1e-4, rtol=1e-4), "mismatch vs reference (aligned)"

    # --- test 2: ragged shapes + forced small tiles to exercise the cdiv grid
    #             (partial blocks on both axes).
    N2, C2 = 10, 200
    logits2 = jax.random.uniform(k3, (N2, C2), jnp.float32, minval=-0.99, maxval=0.99)
    labels2 = jax.random.randint(k4, (N2,), 0, C2, dtype=jnp.int32)
    labels2 = labels2.at[0].set(-1)
    ref2 = _reference(logits2, labels2)
    out2 = jax.block_until_ready(
        arcface_forward(logits2, labels2, tile_n=8, tile_c=128)
    )
    assert jnp.allclose(out2, ref2, atol=1e-4, rtol=1e-4), "mismatch vs reference (ragged)"

    print("KERNEL_OK")
</pallas_src>

<mosaic_0001>
module attributes {stable_mosaic.version = 11 : i64} {
  func.func @_arcface_kernel(%arg0: i32, %arg1: i32, %arg2: memref<8x2xi32, #tpu.memory_space<vmem>>, %arg3: memref<8x256xf32, #tpu.memory_space<vmem>>, %arg4: memref<8x256xf32, #tpu.memory_space<vmem>>) attributes {dimension_semantics = [#tpu.dimension_semantics<parallel>, #tpu.dimension_semantics<parallel>], iteration_bounds = array<i64: 1, 1>, scalar_prefetch = 0 : i64, scratch_operands = 0 : i64, tpu.core_type = #tpu.core_type<tc>, window_params = [{transform_indices = @transform_0, window_bounds = array<i64: 8, 2>}, {transform_indices = @transform_1, window_bounds = array<i64: 8, 256>}, {transform_indices = @transform_2, window_bounds = array<i64: 8, 256>}]} {
    %c0 = arith.constant 0 : index
    %c0_0 = arith.constant 0 : index
    %0 = vector.load %arg3[%c0, %c0_0] : memref<8x256xf32, #tpu.memory_space<vmem>>, vector<8x256xf32>
    %c0_1 = arith.constant 0 : index
    %c0_2 = arith.constant 0 : index
    %1 = vector.load %arg2[%c0_1, %c0_2] : memref<8x2xi32, #tpu.memory_space<vmem>>, vector<8x1xi32>
    %c0_3 = arith.constant 0 : index
    %c1 = arith.constant 1 : index
    %2 = vector.load %arg2[%c0_3, %c1] : memref<8x2xi32, #tpu.memory_space<vmem>>, vector<8x1xi32>
    %3 = tpu.bitcast %2 : vector<8x1xi32> -> vector<8x1xf32>
    %c256_i32 = arith.constant 256 : i32
    %4 = arith.muli %arg1, %c256_i32 : i32
    %5 = vector.broadcast %4 : i32 to vector<8x1xi32>
    %6 = arith.subi %1, %5 : vector<8x1xi32>
    %7 = tpu.iota {dimensions = array<i32: 1>} : vector<8x256xi32>
    %8 = vector.broadcast %6 : vector<8x1xi32> to vector<8x256xi32>
    %9 = arith.cmpi eq, %7, %8 : vector<8x256xi32>
    %10 = vector.shape_cast %3 : vector<8x1xf32> to vector<8x1xf32>
    %11 = vector.broadcast %10 : vector<8x1xf32> to vector<8x256xf32>
    %12 = arith.select %9, %11, %0 : vector<8x256xi1>, vector<8x256xf32>
    %cst = arith.constant 6.400000e+01 : f32
    %13 = vector.broadcast %cst : f32 to vector<8x256xf32>
    %14 = arith.mulf %12, %13 : vector<8x256xf32>
    %c0_4 = arith.constant 0 : index
    %c0_5 = arith.constant 0 : index
    %15 = vector.load %arg4[%c0_4, %c0_5] : memref<8x256xf32, #tpu.memory_space<vmem>>, vector<8x256xf32>
    tpu.vector_store %arg4[%c0_4, %c0_5], %14 {strides = array<i32>} : memref<8x256xf32, #tpu.memory_space<vmem>>, vector<8x256xf32>,
    return
  }
  func.func @transform_0(%arg0: i32, %arg1: i32) -> (i32, i32) {
    %c0_i32 = arith.constant 0 : i32
    %c0_i32_0 = arith.constant 0 : i32
    return %arg0, %c0_i32 : i32, i32
  }
  func.func @transform_1(%arg0: i32, %arg1: i32) -> (i32, i32) {
    %c0_i32 = arith.constant 0 : i32
    return %arg0, %arg1 : i32, i32
  }
  func.func @transform_2(%arg0: i32, %arg1: i32) -> (i32, i32) {
    %c0_i32 = arith.constant 0 : i32
    return %arg0, %arg1 : i32, i32
  }
}

</mosaic_0001>

<llo_original>
// kernel: arcface_forward.1
$region0: #{arcface_forward.1}
  #allocation0 [shape = 'u32[]', space=smem, size = 0x4, offset = 0x4, fixed_abs, tag = 'smem constant byte address 0x4 - core index']
  #allocation1 [shape = 'u32[144,128]{1,0:T(1,128)}', space=vmem, size = 0x12000, scoped, tag = 'internal scratch']
  %s0 = inlined_call_operand.vmem [shape: s32[8,2], index: 0, kind: input, shape index: {}]
  %s1 = inlined_call_operand.hbm [shape: f32[8,256], index: 1, kind: input, shape index: {}, may-alias: {1,2}]
  %s2 = inlined_call_operand.hbm [shape: f32[8,256], index: 2, kind: output, shape index: {}, may-alias: {1,2}]
  %s3 = sld [smem:[#allocation0]]
  $region22: #{arcface_forward.1} parent=0
    _
  %s5 = ssub.s32 1, %s3
  %s6 = scalar_select 0, %s5, %s3
  $region1: #{arcface_forward.1} parent=0
    #allocation2 [shape = 'u8[8192]{0}', space=vmem, size = 0x2000, scoped, tag = 'input window, operand 1, single buffered']
    #allocation3 [shape = 's32[1]{0}', space=sflag, size = 0x4, scoped, tag = 'scoped memory for arcface_forward.1']
    #allocation4 [shape = 's32[1]{0}', space=sflag, size = 0x4, scoped, tag = 'scoped memory for arcface_forward.1']
    #allocation5 [shape = 'u8[8192]{0}', space=vmem, size = 0x2000, scoped, tag = 'output window, operand 0, single buffered']
    %7 = vsyncpa [#allocation3], 0
    %8 = vsyncpa [#allocation4], 0
    // Predicated region
    $region2: #{arcface_forward.1} parent=1 // pred_check
      _
    $region3: #{arcface_forward.1} parent=1 // pred_check_branch
      %10 = sbr.rel (0) target = $region5
    $region4: #{arcface_forward.1} parent=1 // pred_region
      _
    $region5: #{arcface_forward.1} parent=1 // pred_fallthru
      _
    // Predicated region
    $region6: #{arcface_forward.1} parent=1 // pred_check
      _
    $region7: #{arcface_forward.1} parent=1 // pred_check_branch
      %12 = sbr.rel (0) target = $region9
    $region8: #{arcface_forward.1} parent=1 // pred_region
      %s14 = ssub.s32 256, 256
      %15 = vsyncadd [#allocation3], %s14
      %s17 = sshll.u32 [#allocation2], 4
      %s18 = int_to_ptr.vmem [resolvable:$true] %s17
      %20 = dma.hbm_to_vmem [thread:$0]  %s1, 256, %s18, [#allocation3]
    $region9: #{arcface_forward.1} parent=1 // pred_fallthru
      _
    // Predicated region
    $region10: #{arcface_forward.1} parent=1 // pred_check
      _
    $region11: #{arcface_forward.1} parent=1 // pred_check_branch
      %22 = sbr.rel (0) target = $region13
    $region12: #{arcface_forward.1} parent=1 // pred_region
      %23 = dma.done [#allocation3], 256
    $region13: #{arcface_forward.1} parent=1 // pred_fallthru
      _
    %v24 = vld [vmem:[#allocation2] sm:$0xff]
    %v25 = vld [vmem:[#allocation2 + $0x8] sm:$0xff]
    %v26 = vld [vmem:[%s0] sm:$0xff]
    %s27 = smul.u32 0, 256
    %v28 = vstv %s27
    %v29 = vsub.s32 %v26, %v28
    %v30 = vlaneseq
    %v31 = vand.u32 %v30, 127
    %v32 = vadd.s32 %v31, 128
    %33 = vset.pattern.permute.xlu0 0
    %34 = vperm.xlu0 %33, %v29
    %v35 = vpop.permute.xlu0 %34
    %vm36 = vcmp.eq.s32.totalorder %v31, %v35
    %vm37 = vcmp.eq.s32.totalorder %v32, %v35
    %38 = vset.pattern.permute.xlu0 1
    %39 = vperm.xlu0 %38, %v26
    %v40 = vpop.permute.xlu0 %39
    %v42 = vsel %vm36, %v40, %v24
    %v43 = vsel %vm37, %v40, %v25
    %v44 = vmul.f32 %v42, 64.0
    %v45 = vmul.f32 %v43, 64.0
    %46 = vst [vmem:[#allocation5] sm:$0xff] %v44
    %47 = vst [vmem:[#allocation5 + $0x8] sm:$0xff] %v45
    // Predicated region
    $region14: #{arcface_forward.1} parent=1 // pred_check
      _
    $region15: #{arcface_forward.1} parent=1 // pred_check_branch
      %49 = sbr.rel (0) target = $region17
    $region16: #{arcface_forward.1} parent=1 // pred_region
      %s51 = ssub.s32 256, 256
      %52 = vsyncadd [#allocation4], %s51
      %s54 = sshll.u32 [#allocation5], 4
      %s55 = int_to_ptr.vmem [resolvable:$true] %s54
      %57 = dma.vmem_to_hbm [thread:$0]  %s55, 256, %s2, [#allocation4]
    $region17: #{arcface_forward.1} parent=1 // pred_fallthru
      _
    // Predicated region
    $region18: #{arcface_forward.1} parent=1 // pred_check
      _
    $region19: #{arcface_forward.1} parent=1 // pred_check_branch
      %59 = sbr.rel (0) target = $region21
    $region20: #{arcface_forward.1} parent=1 // pred_region
      %60 = dma.done [#allocation4], 256
    $region21: #{arcface_forward.1} parent=1 // pred_fallthru
      _
    %61 = vsyncpa [#allocation3], 1
    %62 = vsyncpa [#allocation4], 1

</llo_original>
